<compile_context>
chip_gen: v7x
topology: tpu7x:2x2x1
jax: 0.10.0
libtpu: 0.0.40
codegen_flags: <defaults>
</compile_context>

<pallas_src>
import functools

import jax
import jax.numpy as jnp
from jax.experimental import pallas as pl
from jax.experimental.pallas import tpu as pltpu

_LANE = 128
_SLACK = 4 * 1024 * 1024  # headroom for compiler-internal scratch


@functools.lru_cache(maxsize=1)
def _vmem_budget():
    """Per-generation scoped-VMEM budget: 3/4 of physical VMEM (~48 MiB on v7x,
    ~96 MiB on v5e/v6e).  Conservative 48 MiB default if the query fails."""
    try:
        cap = getattr(pltpu.get_tpu_info(), "vmem_capacity_bytes", None)
        if cap:
            return int(cap) * 3 // 4
    except Exception:
        pass
    return 48 * 1024 * 1024


def _sublane_align(dtype):
    """Sublane alignment: 8 rows for 32-bit, 16 for bf16/fp16, 32 for 8-bit."""
    return max(8, 32 // jnp.dtype(dtype).itemsize)


def _itemsize(x):
    return jnp.dtype(x.dtype).itemsize


def _pick_block(n, target, align, min_blocks=1):
    """Largest align-multiple divisor of n that is <= target, preferring one that
    yields at least `min_blocks` grid blocks; falls back to the full extent."""
    if n <= align:
        return n
    top = (min(target, n) // align) * align
    divisors = [t for t in range(top, align - 1, -align) if n % t == 0]
    if not divisors:
        return n
    for t in divisors:  # descending
        if n // t >= min_blocks:
            return t
    return divisors[0]


def _max_rows_for_budget(K, n_out, w_elems, x_bytes, o_bytes, w_bytes, budget):
    """Max bm rows so 2*(bm*K*x + bm*n_out*o) + 2*w_elems*w + slack <= budget."""
    fixed = 2 * w_elems * w_bytes + _SLACK
    per_row = 2 * (K * x_bytes + n_out * o_bytes)
    return (budget - fixed) // per_row if budget > fixed else 0


# ---------------------------------------------------------------------------
# Linear projection kernels
# ---------------------------------------------------------------------------
def _linear_kernel(x_ref, w_ref, o_ref):
    o_ref[...] = jnp.dot(x_ref[...], w_ref[...],
                         preferred_element_type=jnp.float32).astype(o_ref.dtype)


def _linear_bias_kernel(x_ref, w_ref, b_ref, o_ref):
    acc = jnp.dot(x_ref[...], w_ref[...], preferred_element_type=jnp.float32)
    o_ref[...] = (acc + b_ref[...].astype(jnp.float32)).astype(o_ref.dtype)


def _qkv_fused_kernel(x_ref, wq_ref, wkv_ref, o_ref, *, dim):
    """One pass over x producing the packed [q | k | v] projection block."""
    x = x_ref[...]
    q = jnp.dot(x, wq_ref[...], preferred_element_type=jnp.float32)
    kv = jnp.dot(x, wkv_ref[...], preferred_element_type=jnp.float32)
    o_ref[:, :dim] = q.astype(o_ref.dtype)
    o_ref[:, dim:] = kv.astype(o_ref.dtype)


# K-tiled accumulating fallback (only used when full-K/N blocks exceed VMEM).
def _matmul_acc_kernel(x_ref, w_ref, o_ref, acc_ref):
    @pl.when(pl.program_id(2) == 0)
    def _init():
        acc_ref[...] = jnp.zeros_like(acc_ref)

    acc_ref[...] += jnp.dot(x_ref[...], w_ref[...],
                            preferred_element_type=jnp.float32)

    @pl.when(pl.program_id(2) == pl.num_programs(2) - 1)
    def _fin():
        o_ref[...] = acc_ref[...].astype(o_ref.dtype)


def _matmul_acc_bias_kernel(x_ref, w_ref, b_ref, o_ref, acc_ref):
    @pl.when(pl.program_id(2) == 0)
    def _init():
        acc_ref[...] = jnp.zeros_like(acc_ref)

    acc_ref[...] += jnp.dot(x_ref[...], w_ref[...],
                            preferred_element_type=jnp.float32)

    @pl.when(pl.program_id(2) == pl.num_programs(2) - 1)
    def _fin():
        o_ref[...] = (acc_ref[...] + b_ref[...].astype(jnp.float32)).astype(o_ref.dtype)


def _linear_tiled(x2d, w, b, budget, sub):
    M, K = x2d.shape
    _, N = w.shape
    bm = _pick_block(M, 512, sub, min_blocks=2)
    bn = _pick_block(N, 512, _LANE)
    bk = _pick_block(K, 1024, _LANE)
    in_specs = [pl.BlockSpec((bm, bk), lambda i, j, k: (i, k)),
                pl.BlockSpec((bk, bn), lambda i, j, k: (k, j))]
    operands = [x2d, w]
    kernel = _matmul_acc_kernel
    if b is not None:
        in_specs.append(pl.BlockSpec((1, bn), lambda i, j, k: (0, j)))
        operands.append(b.reshape(1, N))
        kernel = _matmul_acc_bias_kernel
    return pl.pallas_call(
        kernel,
        out_shape=jax.ShapeDtypeStruct((M, N), x2d.dtype),
        grid=(M // bm, N // bn, K // bk),
        in_specs=in_specs,
        out_specs=pl.BlockSpec((bm, bn), lambda i, j, k: (i, j)),
        scratch_shapes=[pltpu.VMEM((bm, bn), jnp.float32)],
        compiler_params=pltpu.CompilerParams(
            dimension_semantics=("parallel", "parallel", "arbitrary"),
            vmem_limit_bytes=budget),
    )(*operands)


def _linear(x2d, w, b=None):
    """x2d: [M, K] @ w: [K, N] (stored pre-transposed as [in, out]) + optional b."""
    M, K = x2d.shape
    Kw, N = w.shape
    assert K == Kw
    budget = _vmem_budget()
    sub = _sublane_align(x2d.dtype)
    xb, wb, ob = _itemsize(x2d), _itemsize(w), _itemsize(x2d)

    bm_max = _max_rows_for_budget(K, N, K * N, xb, ob, wb, budget)
    if bm_max < min(sub, M):
        return _linear_tiled(x2d, w, b, budget, sub)

    # Fast path: K and N un-tiled -> no accumulator scratch, no pl.when branches.
    bm = _pick_block(M, min(1024, max(sub, bm_max)), sub, min_blocks=2)
    operands = [x2d, w]
    in_specs = [pl.BlockSpec((bm, K), lambda i: (i, 0)),
                pl.BlockSpec((K, N), lambda i: (0, 0))]
    kernel = _linear_kernel
    if b is not None:
        operands.append(b.reshape(1, N))
        in_specs.append(pl.BlockSpec((1, N), lambda i: (0, 0)))
        kernel = _linear_bias_kernel
    return pl.pallas_call(
        kernel,
        out_shape=jax.ShapeDtypeStruct((M, N), x2d.dtype),
        grid=(M // bm,),
        in_specs=in_specs,
        out_specs=pl.BlockSpec((bm, N), lambda i: (i, 0)),
        compiler_params=pltpu.CompilerParams(
            dimension_semantics=("parallel",),
            vmem_limit_bytes=budget),
    )(*operands)


def _qkv_projection(x2d, wq, wkv):
    """x2d: [M, C]; wq: [C, dim]; wkv: [C, 2*dim] -> packed qkv [M, 3*dim]."""
    M, C = x2d.shape
    dim = wq.shape[1]
    n_out = 3 * dim
    budget = _vmem_budget()
    sub = _sublane_align(x2d.dtype)
    xb, wb, ob = _itemsize(x2d), _itemsize(wq), _itemsize(x2d)

    bm_max = _max_rows_for_budget(C, n_out, C * n_out, xb, ob, wb, budget)
    if bm_max < min(sub, M):
        # Weights too large for the one-shot fused kernel: two separate matmuls.
        q = _linear(x2d, wq)
        kv = _linear(x2d, wkv)
        return jnp.concatenate([q, kv], axis=-1)

    bm = _pick_block(M, min(1024, max(sub, bm_max)), sub, min_blocks=2)
    return pl.pallas_call(
        functools.partial(_qkv_fused_kernel, dim=dim),
        out_shape=jax.ShapeDtypeStruct((M, n_out), x2d.dtype),
        grid=(M // bm,),
        in_specs=[pl.BlockSpec((bm, C), lambda i: (i, 0)),
                  pl.BlockSpec((C, dim), lambda i: (0, 0)),
                  pl.BlockSpec((C, 2 * dim), lambda i: (0, 0))],
        out_specs=pl.BlockSpec((bm, n_out), lambda i: (i, 0)),
        compiler_params=pltpu.CompilerParams(
            dimension_semantics=("parallel",),
            vmem_limit_bytes=budget),
    )(x2d, wq, wkv)


# ---------------------------------------------------------------------------
# KV-resident attention kernel over the lane-dense [B, L, H*d] layout
# ---------------------------------------------------------------------------
def _attn_kernel(q_ref, k_ref, v_ref, o_ref, *, scale, num_heads, head_dim):
    """Blocks: q/o (1, bq, H*d), k/v (1, Lk, H*d).  The full per-batch K/V are
    VMEM-resident, so the softmax per head is a single pass (no online state)."""
    for h in range(num_heads):      # static unroll; lane offsets are compile-time
        sl = slice(h * head_dim, (h + 1) * head_dim)
        q = q_ref[0, :, sl]
        q = q * jnp.asarray(scale, q.dtype)          # fold scale into [bq, d] q
        k = k_ref[0, :, sl]                          # [Lk, d]
        v = v_ref[0, :, sl]                          # [Lk, d]

        s = jax.lax.dot_general(q, k, (((1,), (1,)), ((), ())),
                                preferred_element_type=jnp.float32)   # [bq, Lk]
        m = jnp.max(s, axis=-1, keepdims=True)
        p = jnp.exp(s - m)                           # [bq, Lk] f32
        l = jnp.sum(p, axis=-1, keepdims=True)       # [bq, 1]
        o = jnp.dot(p.astype(v.dtype), v, preferred_element_type=jnp.float32)
        o_ref[0, :, sl] = (o / l).astype(o_ref.dtype)   # exact normalization


def _attention(q, k, v, *, num_heads, head_dim,
               q_lane_block=0, k_lane_block=0, v_lane_block=0):
    """q: [B, Lq, *], k/v: [B, Lk, *] -> [B, Lq, dim] in q.dtype.

    q/k/v may alias the same packed projection output; *_lane_block selects the
    dim-wide lane block inside that array (non-zero only when dim % 128 == 0)."""
    B, Lq = q.shape[0], q.shape[1]
    Lk = k.shape[1]
    dim = num_heads * head_dim
    budget = _vmem_budget()
    sub = _sublane_align(q.dtype)
    qb, kb, ob = _itemsize(q), _itemsize(k), _itemsize(q)

    kv_bytes = 2 * 2 * Lk * dim * kb                  # K + V blocks, double-buffered
    if kv_bytes + _SLACK >= budget:
        # TODO(synk): add a KV-tiled online-softmax fallback for sequences whose
        # per-batch K/V exceed the VMEM budget (not reached at UNet-scale shapes).
        raise NotImplementedError("per-batch K/V does not fit the VMEM budget")
    per_row = 2 * dim * (qb + ob) + 2 * Lk * 4        # q/o blocks + f32 score temps
    bq_max = (budget - kv_bytes - _SLACK) // per_row
    min_blocks = 1 if B >= 4 else (2 if B >= 2 else 4)
    bq = _pick_block(Lq, min(512, max(sub, bq_max)), sub, min_blocks=min_blocks)

    qlb, klb, vlb = q_lane_block, k_lane_block, v_lane_block
    kernel = functools.partial(_attn_kernel, scale=float(head_dim) ** -0.5,
                               num_heads=num_heads, head_dim=head_dim)
    return pl.pallas_call(
        kernel,
        out_shape=jax.ShapeDtypeStruct((B, Lq, dim), q.dtype),
        grid=(B, Lq // bq),
        in_specs=[
            pl.BlockSpec((1, bq, dim), lambda b, qi: (b, qi, qlb)),
            pl.BlockSpec((1, Lk, dim), lambda b, qi: (b, 0, klb)),
            pl.BlockSpec((1, Lk, dim), lambda b, qi: (b, 0, vlb)),
        ],
        out_specs=pl.BlockSpec((1, bq, dim), lambda b, qi: (b, qi, 0)),
        compiler_params=pltpu.CompilerParams(
            dimension_semantics=("parallel", "parallel"),
            vmem_limit_bytes=budget),
    )(q, k, v)


# ---------------------------------------------------------------------------
# Module: parameter construction + forward
# ---------------------------------------------------------------------------
def init_mha_params(key, dim, context_dim=None, num_heads=None, head_dim=None,
                    dtype=jnp.float32):
    num_heads = dim // head_dim if head_dim else num_heads
    head_dim = dim // num_heads
    assert num_heads * head_dim == dim
    context_dim = context_dim or dim

    kq, kk, kv, ko, kb = jax.random.split(key, 5)
    # Weights stored pre-transposed [in, out]; k/v packed into one [C', 2*dim]
    # matrix so the k/v projection is a single fused matmul.
    wk = 0.02 * jax.random.normal(kk, (context_dim, dim), dtype)
    wv = 0.02 * jax.random.normal(kv, (context_dim, dim), dtype)
    return {
        "dim": dim, "context_dim": context_dim,
        "num_heads": num_heads, "head_dim": head_dim,
        "wq": 0.02 * jax.random.normal(kq, (dim, dim), dtype),
        "w_kv": jnp.concatenate([wk, wv], axis=1),
        "wo": 0.02 * jax.random.normal(ko, (dim, dim), dtype),
        "bo": 0.02 * jax.random.normal(kb, (dim,), dtype),
    }


def multi_head_attention_forward(params, x, context=None):
    """x: [B, L, C]; context: [B, L', C'] or None.  Returns [B, L, dim]."""
    B, L, C = x.shape
    H, d, dim = params["num_heads"], params["head_dim"], params["dim"]
    lane_packed = (dim % _LANE == 0)

    if context is None:
        # Self-attention: one fused kernel streams x once -> packed [q | k | v].
        qkv = _qkv_projection(x.reshape(B * L, C), params["wq"], params["w_kv"])
        qkv3 = qkv.reshape(B, L, 3 * dim)
        if lane_packed:
            # Read q/k/v straight out of the packed tensor via lane-block offsets.
            o = _attention(qkv3, qkv3, qkv3, num_heads=H, head_dim=d,
                           q_lane_block=0, k_lane_block=1, v_lane_block=2)
        else:
            o = _attention(qkv3[..., :dim], qkv3[..., dim:2 * dim],
                           qkv3[..., 2 * dim:], num_heads=H, head_dim=d)
    else:
        Lc, Cc = context.shape[1], context.shape[2]
        q = _linear(x.reshape(B * L, C), params["wq"]).reshape(B, L, dim)
        kv = _linear(context.reshape(B * Lc, Cc),
                     params["w_kv"]).reshape(B, Lc, 2 * dim)
        if lane_packed:
            o = _attention(q, kv, kv, num_heads=H, head_dim=d,
                           k_lane_block=0, v_lane_block=1)
        else:
            o = _attention(q, kv[..., :dim], kv[..., dim:],
                           num_heads=H, head_dim=d)

    y = _linear(o.reshape(B * L, dim), params["wo"], params["bo"])
    # dropout with p=0.0 is the identity in this forward.
    return y.reshape(B, L, dim)


# ---------------------------------------------------------------------------
# Pure-JAX reference (for correctness checking only)
# ---------------------------------------------------------------------------
def _reference_forward(params, x, context=None):
    ctx = x if context is None else context
    B, L, _ = x.shape
    H, d, dim = params["num_heads"], params["head_dim"], params["dim"]
    wk = params["w_kv"][:, :dim]
    wv = params["w_kv"][:, dim:]
    q = (x.reshape(-1, x.shape[-1]) @ params["wq"]).reshape(B, L, H, d)
    k = (ctx.reshape(-1, ctx.shape[-1]) @ wk).reshape(B, -1, H, d)
    v = (ctx.reshape(-1, ctx.shape[-1]) @ wv).reshape(B, -1, H, d)
    s = jnp.einsum("bqhd,bkhd->bhqk", q, k,
                   preferred_element_type=jnp.float32) * (float(d) ** -0.5)
    p = jax.nn.softmax(s, axis=-1).astype(v.dtype)
    o = jnp.einsum("bhqk,bkhd->bqhd", p, v,
                   preferred_element_type=jnp.float32)
    o = o.astype(x.dtype).reshape(B, L, H * d)
    y = o @ params["wo"] + params["bo"]
    return y.astype(x.dtype)


def _check(name, out, ref, tol):
    out32 = out.astype(jnp.float32)
    ref32 = ref.astype(jnp.float32)
    err = float(jnp.max(jnp.abs(out32 - ref32)))
    scale = float(jnp.max(jnp.abs(ref32))) + 1e-6
    assert err / scale < tol, f"{name}: rel err {err / scale:.3e} >= {tol}"
    assert bool(jnp.all(jnp.isfinite(out32))), f"{name}: non-finite output"


# ---------------------------------------------------------------------------
if __name__ == "__main__":
    key = jax.random.PRNGKey(0)
    kp, kx, kc = jax.random.split(key, 3)

    # Small shapes matching the module (dim=32, 4 heads -> head_dim=8).
    dim, num_heads = 32, 4
    B, L, Lc, context_dim = 2, 16, 16, 32

    params = init_mha_params(kp, dim, context_dim=context_dim, num_heads=num_heads)
    x = jax.random.normal(kx, (B, L, dim), jnp.float32)
    context = jax.random.normal(kc, (B, Lc, context_dim), jnp.float32)

    out_self = multi_head_attention_forward(params, x)            # self-attn path
    out_cross = multi_head_attention_forward(params, x, context)  # cross-attn path
    jax.block_until_ready((out_self, out_cross))
    assert out_self.shape == (B, L, dim) and out_cross.shape == (B, L, dim)
    _check("self_f32", out_self, _reference_forward(params, x), 2e-2)
    _check("cross_f32", out_cross, _reference_forward(params, x, context), 2e-2)

    # bf16 activations/weights: exercises the native-dtype MXU path.
    params_bf16 = {k: (v.astype(jnp.bfloat16) if isinstance(v, jax.Array) else v)
                   for k, v in params.items()}
    out_bf16 = multi_head_attention_forward(params_bf16, x.astype(jnp.bfloat16),
                                            context.astype(jnp.bfloat16))
    jax.block_until_ready(out_bf16)
    _check("cross_bf16", out_bf16,
           _reference_forward(params_bf16, x.astype(jnp.bfloat16),
                              context.astype(jnp.bfloat16)), 6e-2)

    # Larger UNet-like shape (10 heads x 64) exercising the fused QKV kernel,
    # the packed lane-block attention reads (dim % 128 == 0) and multi-Q-tiling.
    dim2, heads2, B2, L2 = 640, 10, 1, 1024
    params2 = init_mha_params(kp, dim2, num_heads=heads2)
    x2 = jax.random.normal(kx, (B2, L2, dim2), jnp.float32)
    out2 = multi_head_attention_forward(params2, x2)
    jax.block_until_ready(out2)
    _check("self_f32_large", out2, _reference_forward(params2, x2), 2e-2)

    print("KERNEL_OK")
</pallas_src>

<mosaic_0001>
module attributes {stable_mosaic.version = 11 : i64} {
  func.func @_qkv_fused_kernel(%arg0: i32, %arg1: memref<16x32xf32, #tpu.memory_space<vmem>>, %arg2: memref<32x32xf32, #tpu.memory_space<vmem>>, %arg3: memref<32x64xf32, #tpu.memory_space<vmem>>, %arg4: memref<16x96xf32, #tpu.memory_space<vmem>>) attributes {dimension_semantics = [#tpu.dimension_semantics<parallel>], iteration_bounds = array<i64: 2>, scalar_prefetch = 0 : i64, scratch_operands = 0 : i64, tpu.core_type = #tpu.core_type<tc>, window_params = [{transform_indices = @transform_0, window_bounds = array<i64: 16, 32>}, {pipeline_mode = #tpu.pipeline_mode<synchronous>, transform_indices = @transform_1, window_bounds = array<i64: 32, 32>}, {pipeline_mode = #tpu.pipeline_mode<synchronous>, transform_indices = @transform_2, window_bounds = array<i64: 32, 64>}, {transform_indices = @transform_3, window_bounds = array<i64: 16, 96>}]} {
    %c0 = arith.constant 0 : index
    %c0_0 = arith.constant 0 : index
    %0 = vector.load %arg1[%c0, %c0_0] : memref<16x32xf32, #tpu.memory_space<vmem>>, vector<16x32xf32>
    %c0_1 = arith.constant 0 : index
    %c0_2 = arith.constant 0 : index
    %1 = vector.load %arg2[%c0_1, %c0_2] : memref<32x32xf32, #tpu.memory_space<vmem>>, vector<32x32xf32>
    %cst = arith.constant dense<0.000000e+00> : vector<16x32xf32>
    %2 = tpu.matmul %0, %1, %cst {dimension_numbers = #tpu.dot_dimension_numbers<[1], [0], [0], [1], [0, 0, 1, 1], [], []>} : vector<16x32xf32>, vector<32x32xf32>, vector<16x32xf32> -> vector<16x32xf32>
    %c0_3 = arith.constant 0 : index
    %c0_4 = arith.constant 0 : index
    %3 = vector.load %arg3[%c0_3, %c0_4] : memref<32x64xf32, #tpu.memory_space<vmem>>, vector<32x64xf32>
    %cst_5 = arith.constant dense<0.000000e+00> : vector<16x64xf32>
    %4 = tpu.matmul %0, %3, %cst_5 {dimension_numbers = #tpu.dot_dimension_numbers<[1], [0], [0], [1], [0, 0, 1, 1], [], []>} : vector<16x32xf32>, vector<32x64xf32>, vector<16x64xf32> -> vector<16x64xf32>
    %c0_6 = arith.constant 0 : index
    %c0_7 = arith.constant 0 : index
    %5 = vector.load %arg4[%c0_6, %c0_7] : memref<16x96xf32, #tpu.memory_space<vmem>>, vector<16x32xf32>
    tpu.vector_store %arg4[%c0_6, %c0_7], %2 {strides = array<i32>} : memref<16x96xf32, #tpu.memory_space<vmem>>, vector<16x32xf32>,
    %c0_8 = arith.constant 0 : index
    %c32 = arith.constant 32 : index
    %6 = vector.load %arg4[%c0_8, %c32] : memref<16x96xf32, #tpu.memory_space<vmem>>, vector<16x64xf32>
    tpu.vector_store %arg4[%c0_8, %c32], %4 {strides = array<i32>} : memref<16x96xf32, #tpu.memory_space<vmem>>, vector<16x64xf32>,
    return
  }
  func.func @transform_0(%arg0: i32) -> (i32, i32) {
    %c0_i32 = arith.constant 0 : i32
    %c0_i32_0 = arith.constant 0 : i32
    return %arg0, %c0_i32 : i32, i32
  }
  func.func @transform_1(%arg0: i32) -> (i32, i32) {
    %c0_i32 = arith.constant 0 : i32
    %c0_i32_0 = arith.constant 0 : i32
    %c0_i32_1 = arith.constant 0 : i32
    return %c0_i32, %c0_i32_0 : i32, i32
  }
  func.func @transform_2(%arg0: i32) -> (i32, i32) {
    %c0_i32 = arith.constant 0 : i32
    %c0_i32_0 = arith.constant 0 : i32
    %c0_i32_1 = arith.constant 0 : i32
    return %c0_i32, %c0_i32_0 : i32, i32
  }
  func.func @transform_3(%arg0: i32) -> (i32, i32) {
    %c0_i32 = arith.constant 0 : i32
    %c0_i32_0 = arith.constant 0 : i32
    return %arg0, %c0_i32 : i32, i32
  }
}

</mosaic_0001>

<llo_original>
// kernel: tpu_custom_call.1
$region0: #{tpu_custom_call.1}
  #allocation0 [shape = 'u32[]', space=smem, size = 0x4, offset = 0x4, fixed_abs, tag = 'smem constant byte address 0x4 - core index']
  #allocation1 [shape = 'u32[144,128]{1,0:T(1,128)}', space=vmem, size = 0x12000, scoped, tag = 'internal scratch']
  %s0 = inlined_call_operand.hbm [shape: f32[32,32], index: 0, kind: input, shape index: {}]
  %s1 = inlined_call_operand.hbm [shape: f32[32,32], index: 1, kind: input, shape index: {}]
  %s2 = inlined_call_operand.hbm [shape: f32[32,64], index: 2, kind: input, shape index: {}]
  %s3 = inlined_call_operand.hbm [shape: f32[32,96], index: 3, kind: output, shape index: {}]
  %s4 = sld [smem:[#allocation0]]
  $region57: #{tpu_custom_call.1} parent=0
    _
  %s6 = ssub.s32 1, %s4
  %s7 = scalar_select 0, %s6, %s4
  $region1: #{tpu_custom_call.1} parent=0
    #allocation2 [shape = 'u8[16384]{0}', space=vmem, size = 0x4000, scoped, tag = 'input window, operand 0']
    #allocation3 [shape = 's32[2]{0}', space=sflag, size = 0x8, scoped, tag = 'scoped memory for tpu_custom_call.1']
    #allocation4 [shape = 's32[2]{0}', space=sflag, size = 0x8, scoped, tag = 'scoped memory for tpu_custom_call.1']
    #allocation5 [shape = 'u8[16384]{0}', space=vmem, size = 0x4000, scoped, tag = 'input window, operand 1, single buffered']
    #allocation6 [shape = 's32[1]{0}', space=sflag, size = 0x4, scoped, tag = 'scoped memory for tpu_custom_call.1']
    #allocation7 [shape = 'u8[16384]{0}', space=vmem, size = 0x4000, scoped, tag = 'input window, operand 2, single buffered']
    #allocation8 [shape = 'u8[16384]{0}', space=vmem, size = 0x4000, scoped, tag = 'output window, operand 0']
    %8 = vsyncpa [#allocation3], 0
    %s9 = scalar_lea.sflag [#allocation3], 1
    %10 = vsyncpa %s9, 0
    %11 = vsyncpa [#allocation6], 0
    %12 = vsyncpa [#allocation4], 0
    %s13 = scalar_lea.sflag [#allocation4], 1
    %14 = vsyncpa %s13, 0
    loop: start=0, step=1, limit=4
    $region2: #{tpu_custom_call.1} parent=1 // loop_pre_header
      _
    $region3: #{tpu_custom_call.1} parent=1 // loop_header
      %s16 = sphi 0, %s20
      %p17 = scmp.ge.s32.totalorder %s16, 4
      %s26 = sphi 0, %s28
      %s29 = sphi 0, %s26
      %s30 = sphi 0, %s29
      %s46 = sphi 0, %s30
      %s50 = sphi 0, %s50
      %s52 = sphi 0, %s50
      %s53 = sphi 0, %s52
      %s67 = sphi 0, %s53
      %s71 = sphi 0, %s71
      %s73 = sphi 0, %s71
      %s74 = sphi 0, %s73
      %s88 = sphi 0, %s74
      %s94 = sphi 0, %s96
      %s97 = sphi 0, %s94
      %s98 = sphi 0, %s97
      %s114 = sphi 0, %s98
    $region4: #{tpu_custom_call.1} parent=1 // loop_header_branch
      %19 = sbr.rel (%p17) target = $region8
    $region5: #{tpu_custom_call.1} parent=1 // loop_body
      %s21 = ssub.s32 %s16, 1
      %s22 = ssub.s32 %s16, 2
      %s23 = sadd.s32 %s16, 1
      %s24 = ssub.s32 %s16, %s23
      %p25 = scmp.eq.s32.totalorder %s24, 0
      %s27 = sadd.s32 %s26, 1
      %s28 = scalar_select %p25, %s26, %s27
      %p31 = pneg %p25
      %p32 = scmp.eq.s32.totalorder %s16, 1
      %p33 = por %p31, %p32
      %p34 = scmp.ne.s32.totalorder %s26, %s29
      %p35 = scmp.eq.s32.totalorder %s16, 0
      %p36 = por %p34, %p35
      %p37 = scmp.ne.s32.totalorder %s26, %s29
      %p38 = scmp.eq.s32.totalorder %s21, 1
      %p39 = por %p37, %p38
      %p40 = scmp.ne.s32.totalorder %s29, %s30
      %p41 = scmp.eq.s32.totalorder %s21, 0
      %p42 = por %p40, %p41
      %p43 = scmp.ne.s32.totalorder %s29, %s30
      %p44 = scmp.eq.s32.totalorder %s22, 1
      %p45 = por %p43, %p44
      %p47 = scmp.ne.s32.totalorder %s30, %s46
      %p48 = scmp.eq.s32.totalorder %s22, 0
      %p49 = por %p47, %p48
      %s51 = sadd.s32 %s50, 1
      %p54 = scmp.eq.s32.totalorder %s16, 1
      %p55 = scmp.ne.s32.totalorder %s50, %s52
      %p56 = scmp.eq.s32.totalorder %s16, 0
      %p57 = por %p55, %p56
      %p58 = scmp.ne.s32.totalorder %s50, %s52
      %p59 = scmp.eq.s32.totalorder %s21, 1
      %p60 = por %p58, %p59
      %p61 = scmp.ne.s32.totalorder %s52, %s53
      %p62 = scmp.eq.s32.totalorder %s21, 0
      %p63 = por %p61, %p62
      %p64 = scmp.ne.s32.totalorder %s52, %s53
      %p65 = scmp.eq.s32.totalorder %s22, 1
      %p66 = por %p64, %p65
      %p68 = scmp.ne.s32.totalorder %s53, %s67
      %p69 = scmp.eq.s32.totalorder %s22, 0
      %p70 = por %p68, %p69
      %s72 = sadd.s32 %s71, 1
      %p75 = scmp.eq.s32.totalorder %s16, 1
      %p76 = scmp.ne.s32.totalorder %s71, %s73
      %p77 = scmp.eq.s32.totalorder %s16, 0
      %p78 = por %p76, %p77
      %p79 = scmp.ne.s32.totalorder %s71, %s73
      %p80 = scmp.eq.s32.totalorder %s21, 1
      %p81 = por %p79, %p80
      %p82 = scmp.ne.s32.totalorder %s73, %s74
      %p83 = scmp.eq.s32.totalorder %s21, 0
      %p84 = por %p82, %p83
      %p85 = scmp.ne.s32.totalorder %s73, %s74
      %p86 = scmp.eq.s32.totalorder %s22, 1
      %p87 = por %p85, %p86
      %p89 = scmp.ne.s32.totalorder %s74, %s88
      %p90 = scmp.eq.s32.totalorder %s22, 0
      %p91 = por %p89, %p90
      %s92 = ssub.s32 %s16, %s23
      %p93 = scmp.eq.s32.totalorder %s92, 0
      %s95 = sadd.s32 %s94, 1
      %s96 = scalar_select %p93, %s94, %s95
      %p99 = pneg %p93
      %p100 = scmp.eq.s32.totalorder %s16, 1
      %p101 = por %p99, %p100
      %p102 = scmp.ne.s32.totalorder %s94, %s97
      %p103 = scmp.eq.s32.totalorder %s16, 0
      %p104 = por %p102, %p103
      %p105 = scmp.ne.s32.totalorder %s94, %s97
      %p106 = scmp.eq.s32.totalorder %s21, 1
      %p107 = por %p105, %p106
      %p108 = scmp.ne.s32.totalorder %s97, %s98
      %p109 = scmp.eq.s32.totalorder %s21, 0
      %p110 = por %p108, %p109
      %p111 = scmp.ne.s32.totalorder %s97, %s98
      %p112 = scmp.eq.s32.totalorder %s22, 1
      %p113 = por %p111, %p112
      %p115 = scmp.ne.s32.totalorder %s98, %s114
      %p116 = scmp.eq.s32.totalorder %s22, 0
      %p117 = por %p115, %p116
      %p118 = scmp.le.s32.totalorder 1, %s16
      %p119 = scmp.lt.s32.totalorder %s16, 3
      %p120 = pnand %p118, %p119
      %p121 = pneg %p120
      // Predicated region
      $region9: #{tpu_custom_call.1} parent=5 // pred_check
        _
      $region10: #{tpu_custom_call.1} parent=5 // pred_check_branch
        %123 = sbr.rel (%p120) target = $region12
      $region11: #{tpu_custom_call.1} parent=5 // pred_region
        %s124 = ssub.s32 %s16, 1
        // Predicated region
        $region13: #{tpu_custom_call.1} parent=11 // pred_check
          %p125 = pneg %p63
        $region14: #{tpu_custom_call.1} parent=11 // pred_check_branch
          %127 = sbr.rel (%p125) target = $region16
        $region15: #{tpu_custom_call.1} parent=11 // pred_region
          %s129 = ssub.s32 512, 512
          %130 = vsyncadd [#allocation6], %s129
          %s131 = sshll.u32 [#allocation5], 4
          %s132 = int_to_ptr.vmem [resolvable:$true] %s131
          %137 = dma.hbm_to_vmem [thread:$0]  %s1, 512, %s132, [#allocation6], 128, 128, 8
        $region16: #{tpu_custom_call.1} parent=11 // pred_fallthru
          _
        // Predicated region
        $region17: #{tpu_custom_call.1} parent=11 // pred_check
          %p138 = pneg %p84
        $region18: #{tpu_custom_call.1} parent=11 // pred_check_branch
          %140 = sbr.rel (%p138) target = $region20
        $region19: #{tpu_custom_call.1} parent=11 // pred_region
          %s142 = ssub.s32 512, 512
          %143 = vsyncadd [#allocation6], %s142
          %s144 = sshll.u32 [#allocation7], 4
          %s145 = int_to_ptr.vmem [resolvable:$true] %s144
          %150 = dma.hbm_to_vmem [thread:$0]  %s2, 512, %s145, [#allocation6], 128, 128, 8
        $region20: #{tpu_custom_call.1} parent=11 // pred_fallthru
          _
      $region12: #{tpu_custom_call.1} parent=5 // pred_fallthru
        _
      %p151 = scmp.lt.s32.totalorder %s16, 2
      // Predicated region
      $region21: #{tpu_custom_call.1} parent=5 // pred_check
        %p152 = pneg %p151
      $region22: #{tpu_custom_call.1} parent=5 // pred_check_branch
        %154 = sbr.rel (%p152) target = $region24
      $region23: #{tpu_custom_call.1} parent=5 // pred_region
        // Predicated region
        $region25: #{tpu_custom_call.1} parent=23 // pred_check
          %p155 = pneg %p36
        $region26: #{tpu_custom_call.1} parent=23 // pred_check_branch
          %157 = sbr.rel (%p155) target = $region28
        $region27: #{tpu_custom_call.1} parent=23 // pred_region
          %s158 = sand.u32 %s26, 1
          %s159 = scalar_lea.sflag [#allocation3], %s158
          %s160 = sand.u32 %s26, 1
          %s161 = smul.addr %s160, 16
          %s162 = scalar_lea.vmem [#allocation2], %s161
          %s163 = smul.u32 2, %s16
          %s165 = ssub.s32 256, 256
          %166 = vsyncadd %s159, %s165
          %s167 = smul.addr %s163, 128
          %s168 = scalar_lea.hbm %s0, %s167
          %s169 = sshll.u32 %s162, 4
          %s170 = int_to_ptr.vmem [resolvable:$true] %s169
          %175 = dma.hbm_to_vmem [thread:$0]  %s168, 256, %s170, %s159, 128, 128, 8
        $region28: #{tpu_custom_call.1} parent=23 // pred_fallthru
          _
      $region24: #{tpu_custom_call.1} parent=5 // pred_fallthru
        _
      %p176 = scmp.le.s32.totalorder 1, %s16
      %p177 = scmp.lt.s32.totalorder %s16, 3
      %p178 = pnand %p176, %p177
      %p179 = pneg %p178
      // Predicated region
      $region29: #{tpu_custom_call.1} parent=5 // pred_check
        _
      $region30: #{tpu_custom_call.1} parent=5 // pred_check_branch
        %181 = sbr.rel (%p178) target = $region32
      $region31: #{tpu_custom_call.1} parent=5 // pred_region
        %s182 = ssub.s32 %s16, 1
        %s183 = sand.u32 %s29, 1
        %s184 = scalar_lea.sflag [#allocation3], %s183
        %s185 = sand.u32 %s29, 1
        %s186 = smul.addr %s185, 16
        %s187 = scalar_lea.vmem [#allocation2], %s186
        // Predicated region
        $region33: #{tpu_custom_call.1} parent=31 // pred_check
          %p188 = pneg %p42
        $region34: #{tpu_custom_call.1} parent=31 // pred_check_branch
          %190 = sbr.rel (%p188) target = $region36
        $region35: #{tpu_custom_call.1} parent=31 // pred_region
          %191 = dma.done %s184, 256
        $region36: #{tpu_custom_call.1} parent=31 // pred_fallthru
          _
        // Predicated region
        $region37: #{tpu_custom_call.1} parent=31 // pred_check
          %p192 = pneg %p63
        $region38: #{tpu_custom_call.1} parent=31 // pred_check_branch
          %194 = sbr.rel (%p192) target = $region40
        $region39: #{tpu_custom_call.1} parent=31 // pred_region
          %195 = dma.done [#allocation6], 512
        $region40: #{tpu_custom_call.1} parent=31 // pred_fallthru
          _
        // Predicated region
        $region41: #{tpu_custom_call.1} parent=31 // pred_check
          %p196 = pneg %p84
        $region42: #{tpu_custom_call.1} parent=31 // pred_check_branch
          %198 = sbr.rel (%p196) target = $region44
        $region43: #{tpu_custom_call.1} parent=31 // pred_region
          %199 = dma.done [#allocation6], 512
        $region44: #{tpu_custom_call.1} parent=31 // pred_fallthru
          _
        %s200 = sand.u32 %s29, 1
        %s201 = scalar_lea.sflag [#allocation3], %s200
        %s202 = sand.u32 %s29, 1
        %s203 = smul.addr %s202, 16
        %s204 = scalar_lea.vmem [#allocation2], %s203
        %p205 = pneg %p42
        %p206 = pneg %p39
        %p207 = pneg %p63
        %p208 = pneg %p60
        %p209 = pneg %p84
        %p210 = pneg %p81
        %p211 = pneg %p110
        %p212 = pneg %p107
        %s213 = sand.u32 %s97, 1
        %s214 = scalar_lea.sflag [#allocation4], %s213
        %s215 = sand.u32 %s97, 1
        %s216 = smul.addr %s215, 16
        %s217 = scalar_lea.vmem [#allocation8], %s216
        %s218 = smul.u32 2, %s21
        %s219 = smul.u32 2, %s21
        %v220 = vld [vmem:[%s187] sm:$0xff]
        %v221 = vld [vmem:[%s187 + $0x8] sm:$0xff]
        %v222 = vld [vmem:[#allocation5] sm:$0xff]
        %v223 = vld [vmem:[#allocation5 + $0x8] sm:$0xff]
        %v224 = vld [vmem:[#allocation5 + $0x10] sm:$0xff]
        %v225 = vld [vmem:[#allocation5 + $0x18] sm:$0xff]
        %vm226 = vcmask 261120
        %v228 = vsel %vm226, %v220, 0
        %v231 = vsel %vm226, %v221, 0
        %233 = vmatprep.subr.mxu0 0.0
        %234 = vmatpush1.msra.mxu0 %v222
        %235 = vmatprep.subr.mxu0 0.0
        %236 = vmatpush1.msra.mxu0 %v223
        %237 = vmatprep.subr.mxu0 0.0
        %238 = vmatpush1.msra.mxu0 %v224
        %239 = vmatprep.subr.mxu0 0.0
        %240 = vmatpush1.msra.mxu0 %v225
        %241 = vmatprep.subr.mxu0 0.0
        %242 = vmatpush1.msra.mxu0 0.0
        %243 = vmatprep.subr.mxu0 0.0
        %244 = vmatpush1.msra.mxu0 0.0
        %245 = vmatprep.subr.mxu0 0.0
        %246 = vmatpush1.msra.mxu0 0.0
        %247 = vmatprep.subr.mxu0 0.0
        %248 = vmatpush1.msra.mxu0 0.0
        %249 = vmatprep.subr.mxu0 0.0
        %250 = vmatpush1.msra.mxu0 0.0
        %251 = vmatprep.subr.mxu0 0.0
        %252 = vmatpush1.msra.mxu0 0.0
        %253 = vmatprep.subr.mxu0 0.0
        %254 = vmatpush1.msra.mxu0 0.0
        %255 = vmatprep.subr.mxu0 0.0
        %256 = vmatpush1.msra.mxu0 0.0
        %257 = vmatprep.subr.mxu0 0.0
        %258 = vmatpush1.msra.mxu0 0.0
        %259 = vmatprep.subr.mxu0 0.0
        %260 = vmatpush1.msra.mxu0 0.0
        %261 = vmatprep.subr.mxu0 0.0
        %262 = vmatpush1.msra.mxu0 0.0
        %263 = vmatprep.subr.mxu0 0.0
        %264 = vmatpush1.msra.mxu0 0.0
        %265 = vmatprep.subr.mxu0 0.0
        %266 = vmatpush1.msra.mxu0 0.0
        %267 = vmatprep.subr.mxu0 0.0
        %268 = vmatpush1.msra.mxu0 0.0
        %269 = vmatprep.subr.mxu0 0.0
        %270 = vmatpush1.msra.mxu0 0.0
        %271 = vmatprep.subr.mxu0 0.0
        %272 = vmatpush1.msra.mxu0 0.0
        %273 = vmatprep.subr.mxu0 0.0
        %274 = vmatpush1.msra.mxu0 0.0
        %275 = vmatprep.subr.mxu0 0.0
        %276 = vmatpush1.msra.mxu0 0.0
        %277 = vmatprep.subr.mxu0 0.0
        %278 = vmatpush1.msra.mxu0 0.0
        %279 = vmatprep.subr.mxu0 0.0
        %280 = vmatpush1.msra.mxu0 0.0
        %281 = vmatprep.subr.mxu0 0.0
        %282 = vmatpush1.msra.mxu0 0.0
        %283 = vmatprep.subr.mxu0 0.0
        %284 = vmatpush1.msra.mxu0 0.0
        %285 = vmatprep.subr.mxu0 0.0
        %286 = vmatpush1.msra.mxu0 0.0
        %287 = vmatprep.subr.mxu0 0.0
        %288 = vmatpush1.msra.mxu0 0.0
        %289 = vmatprep.subr.mxu0 0.0
        %290 = vmatpush1.msra.mxu0 0.0
        %291 = vmatprep.subr.mxu0 0.0
        %292 = vmatpush1.msra.mxu0 0.0
        %293 = vmatprep.subr.mxu0 0.0
        %294 = vmatpush1.msra.mxu0 0.0
        %295 = vmatprep.subr.mxu0 0.0
        %296 = vmatpush1.msra.mxu0 0.0
        %297 = vmatprep.mubr.f32.mxu0 0.0
        %298 = vmatmul.mubr.f32.gmra.mrb[0].mxu0 %v228
        %v299 = vpop.f32.mrb[0].mxu0
        %v300 = vadd.f32 0.0, %v299
        %v301 = vpop.f32.mrb[0].mxu0
        %302 = vmatprep.mubr.f32.mxu0 0.0
        %303 = vmatmul.mubr.f32.gmra.mrb[0].mxu0 %v231
        %v304 = vpop.f32.mrb[0].mxu0
        %v305 = vadd.f32 0.0, %v304
        %v306 = vpop.f32.mrb[0].mxu0
        %307 = vdwg.mxu0
        %v308 = vld [vmem:[#allocation7] sm:$0xff]
        %v309 = vld [vmem:[#allocation7 + $0x8] sm:$0xff]
        %v310 = vld [vmem:[#allocation7 + $0x10] sm:$0xff]
        %v311 = vld [vmem:[#allocation7 + $0x18] sm:$0xff]
        %312 = vmatprep.subr.mxu0 0.0
        %313 = vmatpush1.msra.mxu0 %v308
        %314 = vmatprep.subr.mxu0 0.0
        %315 = vmatpush1.msra.mxu0 %v309
        %316 = vmatprep.subr.mxu0 0.0
        %317 = vmatpush1.msra.mxu0 %v310
        %318 = vmatprep.subr.mxu0 0.0
        %319 = vmatpush1.msra.mxu0 %v311
        %320 = vmatprep.subr.mxu0 0.0
        %321 = vmatpush1.msra.mxu0 0.0
        %322 = vmatprep.subr.mxu0 0.0
        %323 = vmatpush1.msra.mxu0 0.0
        %324 = vmatprep.subr.mxu0 0.0
        %325 = vmatpush1.msra.mxu0 0.0
        %326 = vmatprep.subr.mxu0 0.0
        %327 = vmatpush1.msra.mxu0 0.0
        %328 = vmatprep.subr.mxu0 0.0
        %329 = vmatpush1.msra.mxu0 0.0
        %330 = vmatprep.subr.mxu0 0.0
        %331 = vmatpush1.msra.mxu0 0.0
        %332 = vmatprep.subr.mxu0 0.0
        %333 = vmatpush1.msra.mxu0 0.0
        %334 = vmatprep.subr.mxu0 0.0
        %335 = vmatpush1.msra.mxu0 0.0
        %336 = vmatprep.subr.mxu0 0.0
        %337 = vmatpush1.msra.mxu0 0.0
        %338 = vmatprep.subr.mxu0 0.0
        %339 = vmatpush1.msra.mxu0 0.0
        %340 = vmatprep.subr.mxu0 0.0
        %341 = vmatpush1.msra.mxu0 0.0
        %342 = vmatprep.subr.mxu0 0.0
        %343 = vmatpush1.msra.mxu0 0.0
        %344 = vmatprep.subr.mxu0 0.0
        %345 = vmatpush1.msra.mxu0 0.0
        %346 = vmatprep.subr.mxu0 0.0
        %347 = vmatpush1.msra.mxu0 0.0
        %348 = vmatprep.subr.mxu0 0.0
        %349 = vmatpush1.msra.mxu0 0.0
        %350 = vmatprep.subr.mxu0 0.0
        %351 = vmatpush1.msra.mxu0 0.0
        %352 = vmatprep.subr.mxu0 0.0
        %353 = vmatpush1.msra.mxu0 0.0
        %354 = vmatprep.subr.mxu0 0.0
        %355 = vmatpush1.msra.mxu0 0.0
        %356 = vmatprep.subr.mxu0 0.0
        %357 = vmatpush1.msra.mxu0 0.0
        %358 = vmatprep.subr.mxu0 0.0
        %359 = vmatpush1.msra.mxu0 0.0
        %360 = vmatprep.subr.mxu0 0.0
        %361 = vmatpush1.msra.mxu0 0.0
        %362 = vmatprep.subr.mxu0 0.0
        %363 = vmatpush1.msra.mxu0 0.0
        %364 = vmatprep.subr.mxu0 0.0
        %365 = vmatpush1.msra.mxu0 0.0
        %366 = vmatprep.subr.mxu0 0.0
        %367 = vmatpush1.msra.mxu0 0.0
        %368 = vmatprep.subr.mxu0 0.0
        %369 = vmatpush1.msra.mxu0 0.0
        %370 = vmatprep.subr.mxu0 0.0
        %371 = vmatpush1.msra.mxu0 0.0
        %372 = vmatprep.subr.mxu0 0.0
        %373 = vmatpush1.msra.mxu0 0.0
        %374 = vmatprep.subr.mxu0 0.0
        %375 = vmatpush1.msra.mxu0 0.0
        %376 = vmatprep.mubr.f32.mxu0 0.0
        %377 = vmatmul.mubr.f32.gmra.mrb[0].mxu0 %v228
        %v378 = vpop.f32.mrb[0].mxu0
        %v379 = vadd.f32 0.0, %v378
        %v380 = vpop.f32.mrb[0].mxu0
        %381 = vmatprep.mubr.f32.mxu0 0.0
        %382 = vmatmul.mubr.f32.gmra.mrb[0].mxu0 %v231
        %v383 = vpop.f32.mrb[0].mxu0
        %v384 = vadd.f32 0.0, %v383
        %v385 = vpop.f32.mrb[0].mxu0
        %386 = vdwg.mxu0
        %387 = vst.msk [vmem:[%s217] sm:$0xff] %vm226, %v300
        %388 = vst.msk [vmem:[%s217 + $0x8] sm:$0xff] %vm226, %v305
        %391 = vrot.lane.b32.xlu0 %v379, 32
        %v392 = vpop.permute.xlu0 %391
        %393 = vrot.lane.b32.xlu0 %v384, 32
        %v394 = vpop.permute.xlu0 %393
        %vm397 = vcmask 785664
        %398 = vst.msk [vmem:[%s217] sm:$0xff] %vm397, %v392
        %399 = vst.msk [vmem:[%s217 + $0x8] sm:$0xff] %vm397, %v394
        %s400 = sand.u32 %s97, 1
        %s401 = scalar_lea.sflag [#allocation4], %s400
        %s402 = sand.u32 %s97, 1
        %s403 = smul.addr %s402, 16
        %s404 = scalar_lea.vmem [#allocation8], %s403
        // Predicated region
        $region45: #{tpu_custom_call.1} parent=31 // pred_check
          %p405 = pneg %p107
        $region46: #{tpu_custom_call.1} parent=31 // pred_check_branch
          %407 = sbr.rel (%p405) target = $region48
        $region47: #{tpu_custom_call.1} parent=31 // pred_region
          %s408 = smul.u32 2, %s21
          %s410 = ssub.s32 256, 256
          %411 = vsyncadd %s401, %s410
          %s412 = smul.addr %s408, 128
          %s413 = scalar_lea.hbm %s3, %s412
          %s414 = sshll.u32 %s404, 4
          %s415 = int_to_ptr.vmem [resolvable:$true] %s414
          %420 = dma.vmem_to_hbm [thread:$0]  %s415, 256, %s413, %s401, 128, 128, 8
        $region48: #{tpu_custom_call.1} parent=31 // pred_fallthru
          _
      $region32: #{tpu_custom_call.1} parent=5 // pred_fallthru
        _
      %p421 = scmp.le.s32.totalorder 2, %s16
      // Predicated region
      $region49: #{tpu_custom_call.1} parent=5 // pred_check
        %p422 = pneg %p421
      $region50: #{tpu_custom_call.1} parent=5 // pred_check_branch
        %424 = sbr.rel (%p422) target = $region52
      $region51: #{tpu_custom_call.1} parent=5 // pred_region
        %s425 = ssub.s32 %s16, 2
        // Predicated region
        $region53: #{tpu_custom_call.1} parent=51 // pred_check
          %p426 = pneg %p113
        $region54: #{tpu_custom_call.1} parent=51 // pred_check_branch
          %428 = sbr.rel (%p426) target = $region56
        $region55: #{tpu_custom_call.1} parent=51 // pred_region
          %s429 = sand.u32 %s98, 1
          %s430 = scalar_lea.sflag [#allocation4], %s429
          %s431 = sand.u32 %s98, 1
          %s432 = smul.addr %s431, 16
          %s433 = scalar_lea.vmem [#allocation8], %s432
          %434 = dma.done %s430, 256
        $region56: #{tpu_custom_call.1} parent=51 // pred_fallthru
          _
      $region52: #{tpu_custom_call.1} parent=5 // pred_fallthru
        _
    $region6: #{tpu_custom_call.1} parent=1 // loop_footer
      %s20 = sadd.s32 1, %s16
    $region7: #{tpu_custom_call.1} parent=1 // loop_footer_branch
      %15 = sbr.rel target = $region3
    $region8: #{tpu_custom_call.1} parent=1 // loop_exit
      _
    %435 = vsyncpa [#allocation3], 1
    %s436 = scalar_lea.sflag [#allocation3], 1
    %437 = vsyncpa %s436, 1
    %438 = vsyncpa [#allocation6], 1
    %439 = vsyncpa [#allocation4], 1
    %s440 = scalar_lea.sflag [#allocation4], 1
    %441 = vsyncpa %s440, 1

</llo_original>
